<compile_context>
chip_gen: v6e
topology: v6e:2x2x1
jax: 0.10.0
libtpu: 0.0.40
codegen_flags: <defaults>
</compile_context>

<pallas_src>
import functools

import jax
import jax.numpy as jnp
from jax import lax
from jax.experimental import pallas as pl
from jax.experimental.pallas import tpu as pltpu


# ----------------------------------------------------------------------------
# Tiling policy (HBM-bound op: small tiles + many pipeline steps win)
# ----------------------------------------------------------------------------
_TARGET_TILE_BYTES = 2 << 20     # ~2 MiB per input block (measured sweet spot)
_MAX_TILE_BYTES = 8 << 20        # hard cap per block; x4 buffers ~= 32 MiB
_MIN_STEPS = 8                   # want >= 8 grid steps when the input allows
_VMEM_CAP_BYTES = 48 << 20       # safe on v7x (64 MiB physical per TensorCore)


def _sublane_multiple(dtype):
    # f32 -> 8, bf16 -> 16, int8/fp8 -> 32 (sub-32-bit dtypes pack on sublanes)
    return max(8, 32 // jnp.dtype(dtype).itemsize)


def _divisors(n):
    ds = set()
    i = 1
    while i * i <= n:
        if n % i == 0:
            ds.add(i)
            ds.add(n // i)
        i += 1
    return sorted(ds)


def _batch_tile_candidates(m, dtype):
    sub = _sublane_multiple(dtype)
    cands = [t for t in _divisors(m) if t % sub == 0]
    if m not in cands:
        cands.append(m)
    return sorted(cands)


def _pick(cands, bytes_of, steps_of):
    """Pick the candidate that (a) fits the hard per-block cap, (b) maximizes
    pipeline steps up to _MIN_STEPS, and (c) is closest to the ~2 MiB target."""
    fitting = [c for c in cands if bytes_of(c) <= _MAX_TILE_BYTES]
    pool = fitting if fitting else [min(cands, key=bytes_of)]

    def key(c):
        return (min(steps_of(c), _MIN_STEPS), -abs(bytes_of(c) - _TARGET_TILE_BYTES))

    return max(pool, key=key)


def _vmem_limit(per_step_block_bytes):
    # Double-buffered pipeline => ~2x the per-step working set, plus slack for
    # compiler-internal scratch/semaphores; capped well below v7x's 64 MiB.
    want = 2 * per_step_block_bytes + (4 << 20)
    return int(min(max(want, 16 << 20), _VMEM_CAP_BYTES))


# ----------------------------------------------------------------------------
# Pallas kernels
# ----------------------------------------------------------------------------
def _l2norm_kernel(x_ref, o_ref, *, eps):
    """Fused F.normalize over axis=1 of the block: x * min(rsqrt(sum x^2), 1/eps).

    Block layouts (reduction axis is always axis 1 of the kernel view):
      2-D  input -> block (tb, D)                 : lane reduce
      3-D  view  -> block (tb, C, S)              : sublane reduce
      4-D  view  -> block (tb, C, s_slabs, 128)   : elementwise adds across C
    """
    x = x_ref[...].astype(jnp.float32)
    ss = jnp.sum(x * x, axis=1, keepdims=True)
    inv = jnp.minimum(lax.rsqrt(ss), jnp.float32(1.0 / eps))
    o_ref[...] = (x * inv).astype(o_ref.dtype)


def _ssq_kernel(x_ref, ss_ref):
    """Wide-row pass 1: accumulate per-row sum of squares across column tiles."""
    @pl.when(pl.program_id(1) == 0)
    def _():
        ss_ref[...] = jnp.zeros_like(ss_ref)

    x = x_ref[...].astype(jnp.float32)
    ss_ref[...] += jnp.sum(x * x, axis=1, keepdims=True)


def _scale_kernel(x_ref, ss_ref, o_ref, *, eps):
    """Wide-row pass 2: scale each column tile by the per-row inverse norm."""
    x = x_ref[...].astype(jnp.float32)
    inv = jnp.minimum(lax.rsqrt(ss_ref[...]), jnp.float32(1.0 / eps))
    o_ref[...] = (x * inv).astype(o_ref.dtype)


# ----------------------------------------------------------------------------
# 2-D path
# ----------------------------------------------------------------------------
def _choose_col_tile(d, row_tile, itemsize):
    cands = [t for t in _divisors(d) if t % 128 == 0]
    if not cands:
        return d
    return _pick(cands, lambda t: row_tile * t * itemsize, lambda t: d // t)


def _normalize_2d(x, eps, force_two_pass=False):
    m, d = x.shape
    itemsize = jnp.dtype(x.dtype).itemsize
    row_bytes = d * itemsize

    tb = _pick(_batch_tile_candidates(m, x.dtype),
               lambda t: t * row_bytes, lambda t: m // t)

    if not force_two_pass and tb * row_bytes <= _MAX_TILE_BYTES:
        # Single fused pass, reduce over the lane axis.
        block = (tb, d)
        tile_bytes = tb * row_bytes
        return pl.pallas_call(
            functools.partial(_l2norm_kernel, eps=eps),
            out_shape=jax.ShapeDtypeStruct((m, d), x.dtype),
            grid=(m // tb,),
            in_specs=[pl.BlockSpec(block, lambda i: (i, 0))],
            out_specs=pl.BlockSpec(block, lambda i: (i, 0)),
            compiler_params=pltpu.CompilerParams(
                dimension_semantics=("parallel",),
                vmem_limit_bytes=_vmem_limit(2 * tile_bytes)),
            cost_estimate=pl.CostEstimate(
                flops=3 * m * d, transcendentals=m,
                bytes_accessed=2 * m * d * itemsize),
        )(x)

    # ---- Wide-row two-pass path (huge D): column-tiled reduce + scale. ----
    sub = _sublane_multiple(x.dtype)
    tb = sub if (m >= sub and m % sub == 0) else m
    td = _choose_col_tile(d, tb, itemsize)
    # TODO(synk): if D has no 128-multiple divisor small enough to fit the VMEM
    # budget, this degrades to a single over-wide column tile (best effort).
    grid = (m // tb, d // td)

    ss = pl.pallas_call(
        _ssq_kernel,
        out_shape=jax.ShapeDtypeStruct((m, 1), jnp.float32),
        grid=grid,
        in_specs=[pl.BlockSpec((tb, td), lambda i, j: (i, j))],
        out_specs=pl.BlockSpec((tb, 1), lambda i, j: (i, 0)),
        compiler_params=pltpu.CompilerParams(
            dimension_semantics=("parallel", "arbitrary"),
            vmem_limit_bytes=_vmem_limit(tb * td * itemsize + tb * 4)),
        cost_estimate=pl.CostEstimate(
            flops=2 * m * d, transcendentals=0,
            bytes_accessed=m * d * itemsize + m * 4),
    )(x)

    out = pl.pallas_call(
        functools.partial(_scale_kernel, eps=eps),
        out_shape=jax.ShapeDtypeStruct((m, d), x.dtype),
        grid=grid,
        in_specs=[pl.BlockSpec((tb, td), lambda i, j: (i, j)),
                  pl.BlockSpec((tb, 1), lambda i, j: (i, 0))],
        out_specs=pl.BlockSpec((tb, td), lambda i, j: (i, j)),
        compiler_params=pltpu.CompilerParams(
            dimension_semantics=("parallel", "parallel"),
            vmem_limit_bytes=_vmem_limit(2 * tb * td * itemsize + tb * 4)),
        cost_estimate=pl.CostEstimate(
            flops=m * d + m, transcendentals=m,
            bytes_accessed=2 * m * d * itemsize + m * 4),
    )(x, ss)
    return out


# ----------------------------------------------------------------------------
# rank >= 3 path (NCHW etc.): reduce over dim=1 (channels)
# ----------------------------------------------------------------------------
def _choose_nd_tiles(n, n_slabs, c, itemsize, dtype):
    bt = _batch_tile_candidates(n, dtype)
    st = sorted(set([t for t in _divisors(n_slabs) if t % 8 == 0] + [n_slabs]))
    slab_bytes = c * 128 * itemsize
    combos = [(b, s) for b in bt for s in st]

    def bytes_of(bs):
        return bs[0] * bs[1] * slab_bytes

    def steps_of(bs):
        return (n // bs[0]) * (n_slabs // bs[1])

    return _pick(combos, bytes_of, steps_of)


def _normalize_nd(x, eps):
    orig_shape = x.shape
    n, c = x.shape[0], x.shape[1]
    s = 1
    for dd in x.shape[2:]:
        s *= dd
    itemsize = jnp.dtype(x.dtype).itemsize

    if s % 128 == 0:
        # Dense (N, C, S/128, 128) view: last two dims (8,128)-friendly, the C
        # reduce is plain elementwise adds, and the spatial-slab axis is a
        # second "parallel" grid dim so huge rows are column-tiled.
        n_slabs = s // 128
        xk = x.reshape(n, c, n_slabs, 128)
        tb, st = _choose_nd_tiles(n, n_slabs, c, itemsize, x.dtype)
        block = (tb, c, st, 128)
        grid = (n // tb, n_slabs // st)
        index_map = lambda i, j: (i, 0, j, 0)
        dims = ("parallel", "parallel")
    else:
        # Irregular spatial size: keep (N, C, S) with full C, S in the block.
        # TODO(synk): if a single (tb_min, C, S) block still exceeds the VMEM
        # budget (S not a multiple of 128), this stays a best-effort big block.
        xk = x.reshape(n, c, s)
        row_bytes = c * s * itemsize
        tb = _pick(_batch_tile_candidates(n, x.dtype),
                   lambda t: t * row_bytes, lambda t: n // t)
        block = (tb, c, s)
        grid = (n // tb,)
        index_map = lambda i: (i, 0, 0)
        dims = ("parallel",)

    tile_bytes = itemsize
    for b in block:
        tile_bytes *= b

    out = pl.pallas_call(
        functools.partial(_l2norm_kernel, eps=eps),
        out_shape=jax.ShapeDtypeStruct(xk.shape, xk.dtype),
        grid=grid,
        in_specs=[pl.BlockSpec(block, index_map)],
        out_specs=pl.BlockSpec(block, index_map),
        compiler_params=pltpu.CompilerParams(
            dimension_semantics=dims,
            vmem_limit_bytes=_vmem_limit(2 * tile_bytes)),
        cost_estimate=pl.CostEstimate(
            flops=3 * xk.size, transcendentals=n * s,
            bytes_accessed=2 * xk.size * itemsize),
    )(xk)
    return out.reshape(orig_shape)


# ----------------------------------------------------------------------------
# Public wrapper: F.normalize(x) == L2-normalize along dim=1
# ----------------------------------------------------------------------------
def l2_normalize(x, eps=1e-12):
    if x.ndim < 2:
        raise ValueError("F.normalize with default dim=1 needs rank >= 2 input")
    if x.ndim == 2:
        return _normalize_2d(x, eps)
    return _normalize_nd(x, eps)


# ----------------------------------------------------------------------------
# Reference (plain JAX) for correctness checking
# ----------------------------------------------------------------------------
def _ref_normalize(x, eps=1e-12):
    norm = jnp.sqrt(jnp.sum(x * x, axis=1, keepdims=True))
    return x / jnp.maximum(norm, eps)


# ----------------------------------------------------------------------------
if __name__ == "__main__":
    key = jax.random.PRNGKey(0)
    k2d, k4d, kwide = jax.random.split(key, 3)

    # 2-D input (batch of embedding rows): fused single-pass kernel.
    # m=32 -> tb=8 -> 4 "parallel" grid steps (pipelined, dual-TC friendly).
    x2d = jax.random.normal(k2d, (32, 256), jnp.float32)
    y2d = jax.block_until_ready(l2_normalize(x2d))
    assert y2d.shape == x2d.shape, y2d.shape
    assert bool(jnp.all(jnp.isfinite(y2d)))
    assert bool(jnp.allclose(y2d, _ref_normalize(x2d), atol=1e-5, rtol=1e-5))
    assert bool(jnp.allclose(jnp.linalg.norm(y2d, axis=1), 1.0, atol=1e-4))

    # 4-D NCHW input (N=2, C=4, H=W=16): F.normalize reduces over channels.
    # S=256 is a multiple of 128 -> dense (N, C, 2, 128) view, VPU-add reduce.
    x4d = jax.random.normal(k4d, (2, 4, 16, 16), jnp.float32)
    y4d = jax.block_until_ready(l2_normalize(x4d))
    assert y4d.shape == x4d.shape, y4d.shape
    assert bool(jnp.all(jnp.isfinite(y4d)))
    assert bool(jnp.allclose(y4d, _ref_normalize(x4d), atol=1e-5, rtol=1e-5))

    # Wide-row escape hatch smoke test (forced): two-pass column-tiled kernels.
    xw = jax.random.normal(kwide, (16, 1024), jnp.float32)
    yw = jax.block_until_ready(_normalize_2d(xw, 1e-12, force_two_pass=True))
    assert bool(jnp.allclose(yw, _ref_normalize(xw), atol=1e-5, rtol=1e-5))

    # eps clamp semantics: all-zero rows must produce zeros (no NaN/Inf).
    xz = jnp.zeros((8, 256), jnp.float32)
    yz = jax.block_until_ready(l2_normalize(xz))
    assert bool(jnp.all(yz == 0.0))

    print("KERNEL_OK")
</pallas_src>

<mosaic_0001>
module attributes {stable_mosaic.version = 11 : i64} {
  func.func @_l2norm_kernel(%arg0: i32, %arg1: memref<8x256xf32, #tpu.memory_space<vmem>>, %arg2: memref<8x256xf32, #tpu.memory_space<vmem>>) attributes {dimension_semantics = [#tpu.dimension_semantics<parallel>], iteration_bounds = array<i64: 4>, scalar_prefetch = 0 : i64, scratch_operands = 0 : i64, tpu.core_type = #tpu.core_type<tc>, window_params = [{transform_indices = @transform_0, window_bounds = array<i64: 8, 256>}, {transform_indices = @transform_1, window_bounds = array<i64: 8, 256>}]} {
    %c0 = arith.constant 0 : index
    %c0_0 = arith.constant 0 : index
    %0 = vector.load %arg1[%c0, %c0_0] : memref<8x256xf32, #tpu.memory_space<vmem>>, vector<8x256xf32>
    %1 = arith.mulf %0, %0 : vector<8x256xf32>
    %cst = arith.constant dense<0.000000e+00> : vector<8xf32>
    %2 = vector.multi_reduction <add>, %1, %cst [1] : vector<8x256xf32> to vector<8xf32>
    %3 = vector.shape_cast %2 : vector<8xf32> to vector<8x1xf32>
    %4 = math.rsqrt %3 : vector<8x1xf32>
    %cst_1 = arith.constant 9.99999995E+11 : f32
    %5 = vector.broadcast %cst_1 : f32 to vector<8x1xf32>
    %6 = arith.minimumf %4, %5 : vector<8x1xf32>
    %7 = vector.broadcast %6 : vector<8x1xf32> to vector<8x256xf32>
    %8 = arith.mulf %0, %7 : vector<8x256xf32>
    %c0_2 = arith.constant 0 : index
    %c0_3 = arith.constant 0 : index
    %9 = vector.load %arg2[%c0_2, %c0_3] : memref<8x256xf32, #tpu.memory_space<vmem>>, vector<8x256xf32>
    tpu.vector_store %arg2[%c0_2, %c0_3], %8 {strides = array<i32>} : memref<8x256xf32, #tpu.memory_space<vmem>>, vector<8x256xf32>,
    return
  }
  func.func @transform_0(%arg0: i32) -> (i32, i32) {
    %c0_i32 = arith.constant 0 : i32
    %c0_i32_0 = arith.constant 0 : i32
    return %arg0, %c0_i32 : i32, i32
  }
  func.func @transform_1(%arg0: i32) -> (i32, i32) {
    %c0_i32 = arith.constant 0 : i32
    %c0_i32_0 = arith.constant 0 : i32
    return %arg0, %c0_i32 : i32, i32
  }
}

</mosaic_0001>

<llo_original>
// kernel: tpu_custom_call.1
$region0: #{tpu_custom_call.1}
  #allocation0 [shape = 'u32[]', space=smem, size = 0x4, offset = 0x4, fixed_abs, tag = 'smem constant byte address 0x4 - core index']
  #allocation1 [shape = 'u32[144,128]{1,0:T(1,128)}', space=vmem, size = 0x12000, scoped, tag = 'internal scratch']
  %s0 = inlined_call_operand.hbm [shape: f32[32,256], index: 0, kind: input, shape index: {}]
  %s1 = inlined_call_operand.hbm [shape: f32[32,256], index: 1, kind: output, shape index: {}]
  %s2 = sld [smem:[#allocation0]]
  $region41: #{tpu_custom_call.1} parent=0
    _
  %s4 = ssub.s32 1, %s2
  %s5 = scalar_select 0, %s4, %s2
  $region1: #{tpu_custom_call.1} parent=0
    #allocation2 [shape = 'u8[16384]{0}', space=vmem, size = 0x4000, scoped, tag = 'input window, operand 0']
    #allocation3 [shape = 's32[2]{0}', space=sflag, size = 0x8, scoped, tag = 'scoped memory for tpu_custom_call.1']
    #allocation4 [shape = 's32[2]{0}', space=sflag, size = 0x8, scoped, tag = 'scoped memory for tpu_custom_call.1']
    #allocation5 [shape = 'u8[16384]{0}', space=vmem, size = 0x4000, scoped, tag = 'output window, operand 0']
    %6 = vsyncpa [#allocation3], 0
    %s7 = scalar_lea.sflag [#allocation3], 1
    %8 = vsyncpa %s7, 0
    %9 = vsyncpa [#allocation4], 0
    %s10 = scalar_lea.sflag [#allocation4], 1
    %11 = vsyncpa %s10, 0
    loop: start=0, step=1, limit=6
    $region2: #{tpu_custom_call.1} parent=1 // loop_pre_header
      _
    $region3: #{tpu_custom_call.1} parent=1 // loop_header
      %s13 = sphi 0, %s17
      %p14 = scmp.ge.s32.totalorder %s13, 6
      %s23 = sphi 0, %s25
      %s26 = sphi 0, %s23
      %s27 = sphi 0, %s26
      %s43 = sphi 0, %s27
      %s49 = sphi 0, %s51
      %s52 = sphi 0, %s49
      %s53 = sphi 0, %s52
      %s69 = sphi 0, %s53
    $region4: #{tpu_custom_call.1} parent=1 // loop_header_branch
      %16 = sbr.rel (%p14) target = $region8
    $region5: #{tpu_custom_call.1} parent=1 // loop_body
      %s18 = ssub.s32 %s13, 1
      %s19 = ssub.s32 %s13, 2
      %s20 = sadd.s32 %s13, 1
      %s21 = ssub.s32 %s13, %s20
      %p22 = scmp.eq.s32.totalorder %s21, 0
      %s24 = sadd.s32 %s23, 1
      %s25 = scalar_select %p22, %s23, %s24
      %p28 = pneg %p22
      %p29 = scmp.eq.s32.totalorder %s13, 3
      %p30 = por %p28, %p29
      %p31 = scmp.ne.s32.totalorder %s23, %s26
      %p32 = scmp.eq.s32.totalorder %s13, 0
      %p33 = por %p31, %p32
      %p34 = scmp.ne.s32.totalorder %s23, %s26
      %p35 = scmp.eq.s32.totalorder %s18, 3
      %p36 = por %p34, %p35
      %p37 = scmp.ne.s32.totalorder %s26, %s27
      %p38 = scmp.eq.s32.totalorder %s18, 0
      %p39 = por %p37, %p38
      %p40 = scmp.ne.s32.totalorder %s26, %s27
      %p41 = scmp.eq.s32.totalorder %s19, 3
      %p42 = por %p40, %p41
      %p44 = scmp.ne.s32.totalorder %s27, %s43
      %p45 = scmp.eq.s32.totalorder %s19, 0
      %p46 = por %p44, %p45
      %s47 = ssub.s32 %s13, %s20
      %p48 = scmp.eq.s32.totalorder %s47, 0
      %s50 = sadd.s32 %s49, 1
      %s51 = scalar_select %p48, %s49, %s50
      %p54 = pneg %p48
      %p55 = scmp.eq.s32.totalorder %s13, 3
      %p56 = por %p54, %p55
      %p57 = scmp.ne.s32.totalorder %s49, %s52
      %p58 = scmp.eq.s32.totalorder %s13, 0
      %p59 = por %p57, %p58
      %p60 = scmp.ne.s32.totalorder %s49, %s52
      %p61 = scmp.eq.s32.totalorder %s18, 3
      %p62 = por %p60, %p61
      %p63 = scmp.ne.s32.totalorder %s52, %s53
      %p64 = scmp.eq.s32.totalorder %s18, 0
      %p65 = por %p63, %p64
      %p66 = scmp.ne.s32.totalorder %s52, %s53
      %p67 = scmp.eq.s32.totalorder %s19, 3
      %p68 = por %p66, %p67
      %p70 = scmp.ne.s32.totalorder %s53, %s69
      %p71 = scmp.eq.s32.totalorder %s19, 0
      %p72 = por %p70, %p71
      %p73 = scmp.le.s32.totalorder 1, %s13
      %p74 = scmp.lt.s32.totalorder %s13, 5
      %p75 = pnand %p73, %p74
      %p76 = pneg %p75
      // Predicated region
      $region9: #{tpu_custom_call.1} parent=5 // pred_check
        _
      $region10: #{tpu_custom_call.1} parent=5 // pred_check_branch
        %78 = sbr.rel (%p75) target = $region12
      $region11: #{tpu_custom_call.1} parent=5 // pred_region
        %s79 = ssub.s32 %s13, 1
      $region12: #{tpu_custom_call.1} parent=5 // pred_fallthru
        _
      %p80 = scmp.lt.s32.totalorder %s13, 4
      // Predicated region
      $region13: #{tpu_custom_call.1} parent=5 // pred_check
        %p81 = pneg %p80
      $region14: #{tpu_custom_call.1} parent=5 // pred_check_branch
        %83 = sbr.rel (%p81) target = $region16
      $region15: #{tpu_custom_call.1} parent=5 // pred_region
        // Predicated region
        $region17: #{tpu_custom_call.1} parent=15 // pred_check
          %p84 = pneg %p33
        $region18: #{tpu_custom_call.1} parent=15 // pred_check_branch
          %86 = sbr.rel (%p84) target = $region20
        $region19: #{tpu_custom_call.1} parent=15 // pred_region
          %s87 = sand.u32 %s23, 1
          %s88 = scalar_lea.sflag [#allocation3], %s87
          %s89 = sand.u32 %s23, 1
          %s90 = smul.addr %s89, 16
          %s91 = scalar_lea.vmem [#allocation2], %s90
          %s93 = ssub.s32 256, 256
          %94 = vsyncadd %s88, %s93
          %s95 = smul.addr %s13, 2
          %s96 = smul.addr %s95, 128
          %s97 = scalar_lea.hbm %s0, %s96
          %s99 = sshll.u32 %s91, 4
          %s100 = int_to_ptr.vmem [resolvable:$true] %s99
          %102 = dma.hbm_to_vmem [thread:$0]  %s97, 256, %s100, %s88
        $region20: #{tpu_custom_call.1} parent=15 // pred_fallthru
          _
      $region16: #{tpu_custom_call.1} parent=5 // pred_fallthru
        _
      %p103 = scmp.le.s32.totalorder 1, %s13
      %p104 = scmp.lt.s32.totalorder %s13, 5
      %p105 = pnand %p103, %p104
      %p106 = pneg %p105
      // Predicated region
      $region21: #{tpu_custom_call.1} parent=5 // pred_check
        _
      $region22: #{tpu_custom_call.1} parent=5 // pred_check_branch
        %108 = sbr.rel (%p105) target = $region24
      $region23: #{tpu_custom_call.1} parent=5 // pred_region
        %s109 = ssub.s32 %s13, 1
        %s110 = sand.u32 %s26, 1
        %s111 = scalar_lea.sflag [#allocation3], %s110
        %s112 = sand.u32 %s26, 1
        %s113 = smul.addr %s112, 16
        %s114 = scalar_lea.vmem [#allocation2], %s113
        // Predicated region
        $region25: #{tpu_custom_call.1} parent=23 // pred_check
          %p115 = pneg %p39
        $region26: #{tpu_custom_call.1} parent=23 // pred_check_branch
          %117 = sbr.rel (%p115) target = $region28
        $region27: #{tpu_custom_call.1} parent=23 // pred_region
          %118 = dma.done %s111, 256
        $region28: #{tpu_custom_call.1} parent=23 // pred_fallthru
          _
        %s119 = sand.u32 %s26, 1
        %s120 = scalar_lea.sflag [#allocation3], %s119
        %s121 = sand.u32 %s26, 1
        %s122 = smul.addr %s121, 16
        %s123 = scalar_lea.vmem [#allocation2], %s122
        %p124 = pneg %p39
        %p125 = pneg %p36
        %p126 = pneg %p65
        %p127 = pneg %p62
        %s128 = sand.u32 %s52, 1
        %s129 = scalar_lea.sflag [#allocation4], %s128
        %s130 = sand.u32 %s52, 1
        %s131 = smul.addr %s130, 16
        %s132 = scalar_lea.vmem [#allocation5], %s131
        %v133 = vld [vmem:[%s114] sm:$0xff]
        %v134 = vld [vmem:[%s114 + $0x8] sm:$0xff]
        %v135 = vmul.f32 %v133, %v133
        %v136 = vmul.f32 %v134, %v134
        %v137 = vadd.f32 %v135, %v136
        %138 = vadd.xlane.f32.xlu0 %v137
        %v139 = vpop.xlane.xlu0 %138
        %v140 = vrsqrt.pop %v139
        %v141 = vmin.f32 %v140, 1e+12
        %v142 = vmul.f32 %v133, %v141
        %v143 = vmul.f32 %v134, %v141
        %144 = vst [vmem:[%s132] sm:$0xff] %v142
        %145 = vst [vmem:[%s132 + $0x8] sm:$0xff] %v143
        %s146 = sand.u32 %s52, 1
        %s147 = scalar_lea.sflag [#allocation4], %s146
        %s148 = sand.u32 %s52, 1
        %s149 = smul.addr %s148, 16
        %s150 = scalar_lea.vmem [#allocation5], %s149
        // Predicated region
        $region29: #{tpu_custom_call.1} parent=23 // pred_check
          %p151 = pneg %p62
        $region30: #{tpu_custom_call.1} parent=23 // pred_check_branch
          %153 = sbr.rel (%p151) target = $region32
        $region31: #{tpu_custom_call.1} parent=23 // pred_region
          %s155 = ssub.s32 256, 256
          %156 = vsyncadd %s147, %s155
          %s157 = smul.addr %s18, 2
          %s158 = smul.addr %s157, 128
          %s159 = scalar_lea.hbm %s1, %s158
          %s161 = sshll.u32 %s150, 4
          %s162 = int_to_ptr.vmem [resolvable:$true] %s161
          %164 = dma.vmem_to_hbm [thread:$0]  %s162, 256, %s159, %s147
        $region32: #{tpu_custom_call.1} parent=23 // pred_fallthru
          _
      $region24: #{tpu_custom_call.1} parent=5 // pred_fallthru
        _
      %p165 = scmp.le.s32.totalorder 2, %s13
      // Predicated region
      $region33: #{tpu_custom_call.1} parent=5 // pred_check
        %p166 = pneg %p165
      $region34: #{tpu_custom_call.1} parent=5 // pred_check_branch
        %168 = sbr.rel (%p166) target = $region36
      $region35: #{tpu_custom_call.1} parent=5 // pred_region
        %s169 = ssub.s32 %s13, 2
        // Predicated region
        $region37: #{tpu_custom_call.1} parent=35 // pred_check
          %p170 = pneg %p68
        $region38: #{tpu_custom_call.1} parent=35 // pred_check_branch
          %172 = sbr.rel (%p170) target = $region40
        $region39: #{tpu_custom_call.1} parent=35 // pred_region
          %s173 = sand.u32 %s53, 1
          %s174 = scalar_lea.sflag [#allocation4], %s173
          %s175 = sand.u32 %s53, 1
          %s176 = smul.addr %s175, 16
          %s177 = scalar_lea.vmem [#allocation5], %s176
          %178 = dma.done %s174, 256
        $region40: #{tpu_custom_call.1} parent=35 // pred_fallthru
          _
      $region36: #{tpu_custom_call.1} parent=5 // pred_fallthru
        _
    $region6: #{tpu_custom_call.1} parent=1 // loop_footer
      %s17 = sadd.s32 1, %s13
    $region7: #{tpu_custom_call.1} parent=1 // loop_footer_branch
      %12 = sbr.rel target = $region3
    $region8: #{tpu_custom_call.1} parent=1 // loop_exit
      _
    %179 = vsyncpa [#allocation3], 1
    %s180 = scalar_lea.sflag [#allocation3], 1
    %181 = vsyncpa %s180, 1
    %182 = vsyncpa [#allocation4], 1
    %s183 = scalar_lea.sflag [#allocation4], 1
    %184 = vsyncpa %s183, 1

</llo_original>
